<compile_context>
chip_gen: v6e
topology: v6e:2x2x1
jax: 0.10.0
libtpu: 0.0.40
codegen_flags: <defaults>
</compile_context>

<pallas_src>
import jax
import jax.numpy as jnp
from jax.experimental import pallas as pl
from jax.experimental.pallas import tpu as pltpu

_DEFAULT_CHUNK_BYTES = 32 * 1024 * 1024  # ~32 MiB per DMA chunk
_NUM_DMA_SEMS = 4                        # max DMAs in flight (round-robin)
_MAX_CHUNKS = 64                         # cap on the statically-unrolled issue loop
_TINY_ELEMS = 128                        # below this, skip the kernel launch entirely


# ---------------------------------------------------------------------------
# Primary path: aliased no-op (zero HBM traffic inside the kernel).
# ---------------------------------------------------------------------------
def _alias_identity_kernel(x_hbm_ref, o_hbm_ref):
    # o_hbm_ref is the *same* HBM buffer as x_hbm_ref (input_output_aliases),
    # so the data is already in place: nothing to do.
    del x_hbm_ref, o_hbm_ref


def _identity_alias(x: jax.Array) -> jax.Array:
    return pl.pallas_call(
        _alias_identity_kernel,
        out_shape=jax.ShapeDtypeStruct(x.shape, x.dtype),
        in_specs=[pl.BlockSpec(memory_space=pl.ANY)],   # raw HBM ref, no auto-DMA
        out_specs=pl.BlockSpec(memory_space=pl.ANY),
        input_output_aliases={0: 0},
    )(x)


# ---------------------------------------------------------------------------
# Explicit-copy variant: chunked HBM->HBM DMA (no VMEM bounce, no grid).
# ---------------------------------------------------------------------------
def _make_dma_copy_kernel(chunks, n_sems):
    """Build a kernel that copies `chunks` (static (row_start, n_rows) pairs
    along axis 0) from src HBM to dst HBM with up to `n_sems` DMAs in flight."""

    def kernel(src_ref, dst_ref, sems):
        descs = []
        for idx, (start, nrows) in enumerate(chunks):
            slot = idx % n_sems
            cp = pltpu.make_async_copy(
                src_ref.at[pl.ds(start, nrows)],
                dst_ref.at[pl.ds(start, nrows)],
                sems.at[slot],
            )
            if idx >= n_sems:
                # Free this semaphore slot before reusing it.
                descs[idx - n_sems].wait()
            cp.start()
            descs.append(cp)
        # Drain: the last n_sems descriptors occupy distinct slots.
        for cp in descs[-n_sems:]:
            cp.wait()

    return kernel


def _identity_copy(x: jax.Array,
                   *,
                   chunk_bytes: int = _DEFAULT_CHUNK_BYTES,
                   n_sems: int = _NUM_DMA_SEMS) -> jax.Array:
    """Explicit copy variant of Identity (used when aliasing is unavailable).

    Copies HBM->HBM with the DMA engines only; the TensorCore never touches
    the data, so there is no VMEM residency to budget on any generation.
    """
    if x.ndim == 0 or x.size < _TINY_ELEMS:
        # A kernel launch (hundreds of cycles + DMA round trip) dwarfs copying
        # a few hundred bytes; Identity semantics let us return x directly.
        return x

    itemsize = x.dtype.itemsize
    nbytes = x.size * itemsize
    d0 = x.shape[0]
    row_bytes = (x.size // d0) * itemsize

    # Rows per DMA chunk: target ~chunk_bytes, at least one leading-axis row,
    # and cap the total chunk count so the statically-unrolled issue loop
    # stays small.  (For d0 == 1 this degenerates to a single whole-array DMA.)
    rows = max(1, chunk_bytes // row_bytes)
    rows = max(rows, pl.cdiv(d0, _MAX_CHUNKS))
    chunks = []
    r = 0
    while r < d0:
        n = min(rows, d0 - r)
        chunks.append((r, n))
        r += n
    n_sems = max(1, min(n_sems, len(chunks)))

    return pl.pallas_call(
        _make_dma_copy_kernel(chunks, n_sems),
        out_shape=jax.ShapeDtypeStruct(x.shape, x.dtype),
        in_specs=[pl.BlockSpec(memory_space=pl.ANY)],   # stay in HBM
        out_specs=pl.BlockSpec(memory_space=pl.ANY),    # stay in HBM
        scratch_shapes=[pltpu.SemaphoreType.DMA((n_sems,))],
        cost_estimate=pl.CostEstimate(
            flops=0, transcendentals=0, bytes_accessed=2 * nbytes
        ),
    )(x)


# ---------------------------------------------------------------------------
# Public entry point (Identity.forward).
# ---------------------------------------------------------------------------
def identity(x: jax.Array) -> jax.Array:
    """Pallas implementation of Identity.forward: returns x unchanged.

    Uses the aliased no-op kernel.  For true zero-copy, call it under jit with
    buffer donation: jax.jit(identity, donate_argnums=0).  Without donation,
    XLA inserts at most one defensive copy (still HBM-roofline).  Use
    `_identity_copy` when an explicit, non-aliased copy is required.
    """
    if x.ndim == 0 or x.size == 0:
        return x
    return _identity_alias(x)


if __name__ == "__main__":
    key = jax.random.PRNGKey(0)
    # Identity has no parameters (the `dim` arg is ignored in __init__).
    x = jax.random.normal(key, (2, 4, 16, 16), dtype=jnp.float32)  # NCHW

    # Primary (aliased, zero-HBM-traffic) path.
    y = identity(x)
    jax.block_until_ready(y)
    assert y.shape == x.shape and y.dtype == x.dtype
    assert bool(jnp.array_equal(y, x))

    # Recommended usage: jit + donation -> true zero-copy (donate a copy so
    # `x` stays valid for the checks below).
    ident_jit = jax.jit(identity, donate_argnums=0)
    y_d = ident_jit(jnp.copy(x))
    jax.block_until_ready(y_d)
    assert bool(jnp.array_equal(y_d, x))

    # Explicit-copy variant: whole array fits one HBM->HBM DMA chunk.
    y2 = _identity_copy(x)
    jax.block_until_ready(y2)
    assert y2.shape == x.shape and y2.dtype == x.dtype
    assert bool(jnp.array_equal(y2, x))

    # Multi-chunk path: tiny chunk size forces 16 DMAs round-robining over the
    # 4 semaphores (exercises wait-before-reuse and the final drain).
    xm = jax.random.normal(key, (16, 8, 32), dtype=jnp.float32)
    y3 = _identity_copy(xm, chunk_bytes=1024)
    jax.block_until_ready(y3)
    assert bool(jnp.array_equal(y3, xm))

    # Sub-32-bit dtype through the DMA copy path.
    xb = x.astype(jnp.bfloat16)
    y4 = _identity_copy(xb)
    jax.block_until_ready(y4)
    assert y4.shape == xb.shape and y4.dtype == xb.dtype
    assert bool(jnp.array_equal(y4, xb))

    # Tiny array: no kernel launch at all.
    xt = jax.random.normal(key, (3, 5), dtype=jnp.float32)
    y5 = _identity_copy(xt)
    assert bool(jnp.array_equal(y5, xt))

    print("KERNEL_OK")
</pallas_src>

<mosaic_0001>
module attributes {stable_mosaic.version = 11 : i64} {
  func.func @_alias_identity_kernel(%arg0: memref<2x4x16x16xf32, #tpu.memory_space<any>>, %arg1: memref<2x4x16x16xf32, #tpu.memory_space<any>>) attributes {dimension_semantics = [], scalar_prefetch = 0 : i64, scratch_operands = 0 : i64, tpu.core_type = #tpu.core_type<tc>} {
    return
  }
}

</mosaic_0001>

<llo_original>
// kernel: tpu_custom_call.1
$region0: #{tpu_custom_call.1}
  #allocation0 [shape = 'u32[]', space=smem, size = 0x4, offset = 0x4, fixed_abs, tag = 'smem constant byte address 0x4 - core index']
  #allocation1 [shape = 'u32[144,128]{1,0:T(1,128)}', space=vmem, size = 0x12000, scoped, tag = 'internal scratch']
  %s0 = inlined_call_operand.hbm [shape: f32[2,4,16,16], index: 0, kind: input, shape index: {}, may-alias: {0,1}]
  %s1 = inlined_call_operand.hbm [shape: f32[2,4,16,16], index: 1, kind: output, shape index: {}, may-alias: {0,1}]
  %s2 = sld [smem:[#allocation0]]
  $region2: #{tpu_custom_call.1} parent=0
    _
  %s4 = ssub.s32 1, %s2
  %s5 = scalar_select 0, %s4, %s2

</llo_original>
